<compile_context>
chip_gen: v6e
topology: v6e:2x2x1
jax: 0.10.0
libtpu: 0.0.40
codegen_flags: <defaults>
</compile_context>

<pallas_src>
import functools

import jax
import jax.numpy as jnp
import numpy as np
from jax import lax
from jax.experimental import pallas as pl
from jax.experimental.pallas import tpu as pltpu

_LANE = 128                         # vreg lane width
_SUBLANE = 8                        # f32 sublane count
_K_TILE_MAX = 2048                  # stream the contraction when K exceeds this
_VMEM_TILE_BUDGET = 20 * 1024 * 1024  # keep live tiles well inside v7x's scoped VMEM


def _cdiv(a, b):
    return -(-a // b)


def _round_up(a, b):
    return _cdiv(a, b) * b


def _patch_proj_kernel(x_ref, w_ref, b_ref, o_ref, acc_ref):
    # x_ref: (tm, tk) bf16 patch rows, w_ref: (tk, E_pad) bf16, b_ref: (1, E_pad) f32,
    # o_ref: (tm, E_pad), acc_ref: (tm, E_pad) f32 accumulator (resident across k).
    k = pl.program_id(1)

    @pl.when(k == 0)
    def _init():
        acc_ref[...] = jnp.zeros_like(acc_ref)

    acc_ref[...] += jnp.dot(x_ref[...], w_ref[...],
                            preferred_element_type=jnp.float32)

    @pl.when(k == pl.num_programs(1) - 1)
    def _finalize():
        o_ref[...] = (acc_ref[...] + b_ref[...]).astype(o_ref.dtype)


@functools.partial(jax.jit, static_argnames=("patch_size",))
def patch_embed_3d(x, weight, bias, *, patch_size):
    """Equivalent of PatchEmbed3D.forward.

    x:      (B, C, D, H, W)  float32
    weight: (E, C, p, p, p)  float32   (Conv3d weight, kernel=stride=p)
    bias:   (E,)             float32
    returns (B, n_patches, E)  (same dtype as x)
    """
    p = patch_size
    B, C, D, H, W = x.shape
    E = weight.shape[0]
    nd, nh, nw = D // p, H // p, W // p
    n_patches = nd * nh * nw
    K = C * p * p * p
    M = B * n_patches

    # --- glue: patch extraction in conv-output (d, h, w) order, done in bf16 so the
    # cast fuses into the transpose (one f32 read of x, one bf16 write). ---
    xb = x.astype(jnp.bfloat16)
    xp = xb.reshape(B, C, nd, p, nh, p, nw, p)
    xp = xp.transpose(0, 2, 4, 6, 1, 3, 5, 7).reshape(M, K)      # (M, K), K = (c,pd,ph,pw)

    wk = weight.reshape(E, K).T.astype(jnp.bfloat16)             # (K, E)
    b2 = bias.reshape(1, E).astype(jnp.float32)                  # (1, E)

    # --- tiling ---
    E_pad = _round_up(E, _LANE)                 # lane-dense output -> unmasked stores
    if K <= _K_TILE_MAX:
        tk, K_pad = K, K                        # weight fully resident along K
    else:
        tk = _K_TILE_MAX
        K_pad = _round_up(K, tk)
    grid_k = K_pad // tk
    n_w_buf = 1 if grid_k == 1 else 2           # single-buffer a grid-invariant weight

    # Row tile: <= 512 rows, 8-aligned, >= 2 grid steps when possible (v7x: 2 TCs),
    # shrunk until the live VMEM footprint fits the budget.
    n_tiles = max(2, _cdiv(M, 512)) if M > _SUBLANE else 1
    tm = _round_up(_cdiv(M, n_tiles), _SUBLANE)

    def _vmem_need(tm_):
        return (2 * tm_ * tk * 2                # x tile, bf16, double-buffered
                + n_w_buf * tk * E_pad * 2      # weight slab(s), bf16
                + 2 * tm_ * E_pad * 4           # output tile, double-buffered
                + tm_ * E_pad * 4               # f32 accumulator
                + E_pad * 4)                    # bias

    while tm > _SUBLANE and _vmem_need(tm) > _VMEM_TILE_BUDGET:
        tm = _round_up(max(_SUBLANE, tm // 2), _SUBLANE)
    need = _vmem_need(tm)

    grid_m = _cdiv(M, tm)
    M_pad = grid_m * tm

    # --- zero padding (padded rows -> bias only, padded K/E columns -> zero; sliced off) ---
    if M_pad != M or K_pad != K:
        xp = jnp.pad(xp, ((0, M_pad - M), (0, K_pad - K)))
    if K_pad != K or E_pad != E:
        wk = jnp.pad(wk, ((0, K_pad - K), (0, E_pad - E)))
    if E_pad != E:
        b2 = jnp.pad(b2, ((0, 0), (0, E_pad - E)))

    x_spec = pl.BlockSpec((tm, tk), lambda i, k: (i, k))
    w_spec = pl.BlockSpec((tk, E_pad), lambda i, k: (k, 0),
                          pipeline_mode=pl.Buffered(1) if grid_k == 1 else None)
    b_spec = pl.BlockSpec((1, E_pad), lambda i, k: (0, 0),
                          pipeline_mode=pl.Buffered(1))
    o_spec = pl.BlockSpec((tm, E_pad), lambda i, k: (i, 0))

    vmem_limit = int(min(max(2 * need, 32 * 1024 * 1024), 48 * 1024 * 1024))
    cost = pl.CostEstimate(
        flops=2 * M_pad * K_pad * E_pad,
        transcendentals=0,
        bytes_accessed=(M_pad * K_pad * 2 + K_pad * E_pad * 2
                        + E_pad * 4 + M_pad * E_pad * 4),
    )

    out = pl.pallas_call(
        _patch_proj_kernel,
        out_shape=jax.ShapeDtypeStruct((M_pad, E_pad), x.dtype),
        grid_spec=pltpu.PrefetchScalarGridSpec(
            num_scalar_prefetch=0,
            grid=(grid_m, grid_k),
            in_specs=[x_spec, w_spec, b_spec],
            out_specs=o_spec,
            scratch_shapes=[pltpu.VMEM((tm, E_pad), jnp.float32)],
        ),
        compiler_params=pltpu.CompilerParams(
            dimension_semantics=("parallel", "arbitrary"),
            vmem_limit_bytes=vmem_limit,
        ),
        cost_estimate=cost,
    )(xp, wk, b2)

    return out[:M, :E].reshape(B, n_patches, E)


def _reference(x, weight, bias, patch_size):
    """Pure-JAX reference using lax conv (matches PyTorch Conv3d semantics)."""
    p = patch_size
    y = lax.conv_general_dilated(
        x, weight,
        window_strides=(p, p, p),
        padding="VALID",
        dimension_numbers=("NCDHW", "OIDHW", "NCDHW"),
        precision=lax.Precision.HIGHEST,
    )
    y = y + bias.reshape(1, -1, 1, 1, 1)
    B, E = y.shape[0], y.shape[1]
    return y.reshape(B, E, -1).transpose(0, 2, 1)       # flatten(2).transpose(1, 2)


if __name__ == "__main__":
    # Small, module-consistent shapes: img_size=16, patch_size=4, in_c=2, embed_dim=96
    # (embed_dim=96 is the module default; pads to 128 lanes in the kernel).
    B, C, IMG, P, EMB = 2, 2, 16, 4, 96
    assert IMG % P == 0

    key = jax.random.PRNGKey(0)
    kx, kw, kb = jax.random.split(key, 3)

    x = jax.random.normal(kx, (B, C, IMG, IMG, IMG), dtype=jnp.float32)
    # Deterministic parameter init (Conv3d weight/bias shapes from __init__).
    fan_in = C * P * P * P
    bound = 1.0 / np.sqrt(fan_in)
    weight = jax.random.uniform(kw, (EMB, C, P, P, P), jnp.float32, -bound, bound)
    bias = jax.random.uniform(kb, (EMB,), jnp.float32, -bound, bound)

    out = patch_embed_3d(x, weight, bias, patch_size=P)
    out = jax.block_until_ready(out)

    ref = _reference(x, weight, bias, P)
    assert out.shape == (B, (IMG // P) ** 3, EMB), out.shape
    # bf16 MXU operands (f32 accumulation) -> loosened tolerance vs the f32 conv reference.
    np.testing.assert_allclose(np.asarray(out), np.asarray(ref), rtol=2e-2, atol=2e-2)

    print("KERNEL_OK")
</pallas_src>

<mosaic_0001>
module attributes {stable_mosaic.version = 11 : i64} {
  func.func @_patch_proj_kernel(%arg0: i32, %arg1: i32, %arg2: memref<64x128xbf16, #tpu.memory_space<vmem>>, %arg3: memref<128x128xbf16, #tpu.memory_space<vmem>>, %arg4: memref<1x128xf32, #tpu.memory_space<vmem>>, %arg5: memref<64x128xf32, #tpu.memory_space<vmem>>, %arg6: memref<64x128xf32, #tpu.memory_space<vmem>>) attributes {dimension_semantics = [#tpu.dimension_semantics<parallel>, #tpu.dimension_semantics<arbitrary>], iteration_bounds = array<i64: 2, 1>, scalar_prefetch = 0 : i64, scratch_operands = 1 : i64, tpu.core_type = #tpu.core_type<tc>, window_params = [{transform_indices = @transform_0, window_bounds = array<i64: 64, 128>}, {pipeline_mode = #tpu.pipeline_mode<synchronous>, transform_indices = @transform_1, window_bounds = array<i64: 128, 128>}, {pipeline_mode = #tpu.pipeline_mode<synchronous>, transform_indices = @transform_2, window_bounds = array<i64: 1, 128>}, {transform_indices = @transform_3, window_bounds = array<i64: 64, 128>}]} {
    %c0_i32 = arith.constant 0 : i32
    %0 = arith.cmpi eq, %arg1, %c0_i32 : i32
    %1 = arith.extui %0 : i1 to i32
    %c0_i32_0 = arith.constant 0 : i32
    %2 = arith.cmpi ne, %1, %c0_i32_0 : i32
    scf.if %2 {
      %cst_10 = arith.constant 0.000000e+00 : f32
      %12 = vector.broadcast %cst_10 : f32 to vector<64x128xf32>
      %c0_11 = arith.constant 0 : index
      %c0_12 = arith.constant 0 : index
      %13 = vector.load %arg6[%c0_11, %c0_12] : memref<64x128xf32, #tpu.memory_space<vmem>>, vector<64x128xf32>
      tpu.vector_store %arg6[%c0_11, %c0_12], %12 {strides = array<i32>} : memref<64x128xf32, #tpu.memory_space<vmem>>, vector<64x128xf32>,
    } else {
    }
    %c0 = arith.constant 0 : index
    %c0_1 = arith.constant 0 : index
    %3 = vector.load %arg6[%c0, %c0_1] : memref<64x128xf32, #tpu.memory_space<vmem>>, vector<64x128xf32>
    %c0_2 = arith.constant 0 : index
    %c0_3 = arith.constant 0 : index
    %4 = vector.load %arg2[%c0_2, %c0_3] : memref<64x128xbf16, #tpu.memory_space<vmem>>, vector<64x128xbf16>
    %c0_4 = arith.constant 0 : index
    %c0_5 = arith.constant 0 : index
    %5 = vector.load %arg3[%c0_4, %c0_5] : memref<128x128xbf16, #tpu.memory_space<vmem>>, vector<128x128xbf16>
    %cst = arith.constant dense<0.000000e+00> : vector<64x128xf32>
    %6 = tpu.matmul %4, %5, %cst {dimension_numbers = #tpu.dot_dimension_numbers<[1], [0], [0], [1], [0, 0, 1, 1], [], []>} : vector<64x128xbf16>, vector<128x128xbf16>, vector<64x128xf32> -> vector<64x128xf32>
    %7 = arith.addf %3, %6 : vector<64x128xf32>
    %c0_6 = arith.constant 0 : index
    %c0_7 = arith.constant 0 : index
    %8 = vector.load %arg6[%c0_6, %c0_7] : memref<64x128xf32, #tpu.memory_space<vmem>>, vector<64x128xf32>
    tpu.vector_store %arg6[%c0_6, %c0_7], %7 {strides = array<i32>} : memref<64x128xf32, #tpu.memory_space<vmem>>, vector<64x128xf32>,
    %c0_i32_8 = arith.constant 0 : i32
    %9 = arith.cmpi eq, %arg1, %c0_i32_8 : i32
    %10 = arith.extui %9 : i1 to i32
    %c0_i32_9 = arith.constant 0 : i32
    %11 = arith.cmpi ne, %10, %c0_i32_9 : i32
    scf.if %11 {
      %c0_10 = arith.constant 0 : index
      %c0_11 = arith.constant 0 : index
      %12 = vector.load %arg6[%c0_10, %c0_11] : memref<64x128xf32, #tpu.memory_space<vmem>>, vector<64x128xf32>
      %c0_12 = arith.constant 0 : index
      %c0_13 = arith.constant 0 : index
      %13 = vector.load %arg4[%c0_12, %c0_13] : memref<1x128xf32, #tpu.memory_space<vmem>>, vector<1x128xf32>
      %14 = vector.broadcast %13 : vector<1x128xf32> to vector<64x128xf32>
      %15 = arith.addf %12, %14 : vector<64x128xf32>
      %c0_14 = arith.constant 0 : index
      %c0_15 = arith.constant 0 : index
      %16 = vector.load %arg5[%c0_14, %c0_15] : memref<64x128xf32, #tpu.memory_space<vmem>>, vector<64x128xf32>
      tpu.vector_store %arg5[%c0_14, %c0_15], %15 {strides = array<i32>} : memref<64x128xf32, #tpu.memory_space<vmem>>, vector<64x128xf32>,
    } else {
    }
    return
  }
  func.func @transform_0(%arg0: i32, %arg1: i32) -> (i32, i32) {
    %c0_i32 = arith.constant 0 : i32
    return %arg0, %arg1 : i32, i32
  }
  func.func @transform_1(%arg0: i32, %arg1: i32) -> (i32, i32) {
    %c0_i32 = arith.constant 0 : i32
    %c0_i32_0 = arith.constant 0 : i32
    return %arg1, %c0_i32 : i32, i32
  }
  func.func @transform_2(%arg0: i32, %arg1: i32) -> (i32, i32) {
    %c0_i32 = arith.constant 0 : i32
    %c0_i32_0 = arith.constant 0 : i32
    %c0_i32_1 = arith.constant 0 : i32
    return %c0_i32, %c0_i32_0 : i32, i32
  }
  func.func @transform_3(%arg0: i32, %arg1: i32) -> (i32, i32) {
    %c0_i32 = arith.constant 0 : i32
    %c0_i32_0 = arith.constant 0 : i32
    return %arg0, %c0_i32 : i32, i32
  }
}

</mosaic_0001>

<llo_original>
// kernel: patch_embed_3d.1
$region0: #{patch_embed_3d.1}
  #allocation0 [shape = 'u32[]', space=smem, size = 0x4, offset = 0x4, fixed_abs, tag = 'smem constant byte address 0x4 - core index']
  #allocation1 [shape = 'u32[144,128]{1,0:T(1,128)}', space=vmem, size = 0x12000, scoped, tag = 'internal scratch']
  #allocation2 [shape = 'f32[64,128]{1,0:T(8,128)}', space=vmem, size = 0x8000, scoped, tag = 'scratch operand']
  %s0 = inlined_call_operand.vmem [shape: bf16[128,128], index: 0, kind: input, shape index: {}]
  %s1 = inlined_call_operand.vmem [shape: bf16[128,128], index: 1, kind: input, shape index: {}]
  %s2 = inlined_call_operand.vmem [shape: f32[1,128], index: 2, kind: input, shape index: {}]
  %s3 = inlined_call_operand.hbm [shape: f32[128,128], index: 3, kind: output, shape index: {}]
  %s4 = sld [smem:[#allocation0]]
  $region53: #{patch_embed_3d.1} parent=0
    _
  %s6 = ssub.s32 1, %s4
  %s7 = scalar_select 0, %s6, %s4
  $region1: #{patch_embed_3d.1} parent=0
    #allocation3 [shape = 'u8[65536]{0}', space=vmem, size = 0x10000, scoped, tag = 'output window, operand 0']
    #allocation4 [shape = 's32[2]{0}', space=sflag, size = 0x8, scoped, tag = 'scoped memory for patch_embed_3d.1']
    %8 = vsyncpa [#allocation4], 0
    %s9 = scalar_lea.sflag [#allocation4], 1
    %10 = vsyncpa %s9, 0
    loop: start=0, step=1, limit=4
    $region2: #{patch_embed_3d.1} parent=1 // loop_pre_header
      _
    $region3: #{patch_embed_3d.1} parent=1 // loop_header
      %s12 = sphi 0, %s16
      %p13 = scmp.ge.s32.totalorder %s12, 4
      %s19 = sphi 0, %s31
      %s20 = sphi 0, %s27
      %s21 = sphi 0, %s19
      %s22 = sphi 0, %s20
      %s23 = sphi 0, %s21
      %s24 = sphi 0, %s22
      %s36 = sphi 0, %s38
      %s39 = sphi 0, %s36
      %s40 = sphi 0, %s39
      %s56 = sphi 0, %s40
      %s62 = sphi 0, %s64
      %s65 = sphi 0, %s62
      %s66 = sphi 0, %s65
      %s82 = sphi 0, %s66
      %s86 = sphi 0, %s86
      %s88 = sphi 0, %s86
      %s89 = sphi 0, %s88
      %s103 = sphi 0, %s89
      %s109 = sphi 0, %s111
      %s112 = sphi 0, %s109
      %s113 = sphi 0, %s112
      %s129 = sphi 0, %s113
    $region4: #{patch_embed_3d.1} parent=1 // loop_header_branch
      %15 = sbr.rel (%p13) target = $region8
    $region5: #{patch_embed_3d.1} parent=1 // loop_body
      %s17 = ssub.s32 %s12, 1
      %s18 = ssub.s32 %s12, 2
      %s25 = sadd.s32 1, %s20
      %p26 = scmp.ge.s32.totalorder %s25, 1
      %s27 = scalar_select %p26, 0, %s25
      %s28 = sadd.s32 1, %s19
      %s29 = scalar_select %p26, %s28, %s19
      %p30 = scmp.ge.s32.totalorder %s29, 2
      %s31 = scalar_select %p30, 0, %s29
      %s32 = ssub.s32 %s19, %s31
      %s33 = ssub.s32 %s20, %s27
      %s34 = sor.u32 %s32, %s33
      %p35 = scmp.eq.s32.totalorder %s34, 0
      %s37 = sadd.s32 %s36, 1
      %s38 = scalar_select %p35, %s36, %s37
      %p41 = pneg %p35
      %p42 = scmp.eq.s32.totalorder %s12, 1
      %p43 = por %p41, %p42
      %p44 = scmp.ne.s32.totalorder %s36, %s39
      %p45 = scmp.eq.s32.totalorder %s12, 0
      %p46 = por %p44, %p45
      %p47 = scmp.ne.s32.totalorder %s36, %s39
      %p48 = scmp.eq.s32.totalorder %s17, 1
      %p49 = por %p47, %p48
      %p50 = scmp.ne.s32.totalorder %s39, %s40
      %p51 = scmp.eq.s32.totalorder %s17, 0
      %p52 = por %p50, %p51
      %p53 = scmp.ne.s32.totalorder %s39, %s40
      %p54 = scmp.eq.s32.totalorder %s18, 1
      %p55 = por %p53, %p54
      %p57 = scmp.ne.s32.totalorder %s40, %s56
      %p58 = scmp.eq.s32.totalorder %s18, 0
      %p59 = por %p57, %p58
      %s60 = ssub.s32 %s20, %s27
      %p61 = scmp.eq.s32.totalorder %s60, 0
      %s63 = sadd.s32 %s62, 1
      %s64 = scalar_select %p61, %s62, %s63
      %p67 = pneg %p61
      %p68 = scmp.eq.s32.totalorder %s12, 1
      %p69 = por %p67, %p68
      %p70 = scmp.ne.s32.totalorder %s62, %s65
      %p71 = scmp.eq.s32.totalorder %s12, 0
      %p72 = por %p70, %p71
      %p73 = scmp.ne.s32.totalorder %s62, %s65
      %p74 = scmp.eq.s32.totalorder %s17, 1
      %p75 = por %p73, %p74
      %p76 = scmp.ne.s32.totalorder %s65, %s66
      %p77 = scmp.eq.s32.totalorder %s17, 0
      %p78 = por %p76, %p77
      %p79 = scmp.ne.s32.totalorder %s65, %s66
      %p80 = scmp.eq.s32.totalorder %s18, 1
      %p81 = por %p79, %p80
      %p83 = scmp.ne.s32.totalorder %s66, %s82
      %p84 = scmp.eq.s32.totalorder %s18, 0
      %p85 = por %p83, %p84
      %s87 = sadd.s32 %s86, 1
      %p90 = scmp.eq.s32.totalorder %s12, 1
      %p91 = scmp.ne.s32.totalorder %s86, %s88
      %p92 = scmp.eq.s32.totalorder %s12, 0
      %p93 = por %p91, %p92
      %p94 = scmp.ne.s32.totalorder %s86, %s88
      %p95 = scmp.eq.s32.totalorder %s17, 1
      %p96 = por %p94, %p95
      %p97 = scmp.ne.s32.totalorder %s88, %s89
      %p98 = scmp.eq.s32.totalorder %s17, 0
      %p99 = por %p97, %p98
      %p100 = scmp.ne.s32.totalorder %s88, %s89
      %p101 = scmp.eq.s32.totalorder %s18, 1
      %p102 = por %p100, %p101
      %p104 = scmp.ne.s32.totalorder %s89, %s103
      %p105 = scmp.eq.s32.totalorder %s18, 0
      %p106 = por %p104, %p105
      %s107 = ssub.s32 %s19, %s31
      %p108 = scmp.eq.s32.totalorder %s107, 0
      %s110 = sadd.s32 %s109, 1
      %s111 = scalar_select %p108, %s109, %s110
      %p114 = pneg %p108
      %p115 = scmp.eq.s32.totalorder %s12, 1
      %p116 = por %p114, %p115
      %p117 = scmp.ne.s32.totalorder %s109, %s112
      %p118 = scmp.eq.s32.totalorder %s12, 0
      %p119 = por %p117, %p118
      %p120 = scmp.ne.s32.totalorder %s109, %s112
      %p121 = scmp.eq.s32.totalorder %s17, 1
      %p122 = por %p120, %p121
      %p123 = scmp.ne.s32.totalorder %s112, %s113
      %p124 = scmp.eq.s32.totalorder %s17, 0
      %p125 = por %p123, %p124
      %p126 = scmp.ne.s32.totalorder %s112, %s113
      %p127 = scmp.eq.s32.totalorder %s18, 1
      %p128 = por %p126, %p127
      %p130 = scmp.ne.s32.totalorder %s113, %s129
      %p131 = scmp.eq.s32.totalorder %s18, 0
      %p132 = por %p130, %p131
      %p133 = scmp.le.s32.totalorder 1, %s12
      %p134 = scmp.lt.s32.totalorder %s12, 3
      %p135 = pnand %p133, %p134
      %p136 = pneg %p135
      // Predicated region
      $region9: #{patch_embed_3d.1} parent=5 // pred_check
        _
      $region10: #{patch_embed_3d.1} parent=5 // pred_check_branch
        %138 = sbr.rel (%p135) target = $region12
      $region11: #{patch_embed_3d.1} parent=5 // pred_region
        %s139 = ssub.s32 %s12, 1
        // Predicated region
        $region13: #{patch_embed_3d.1} parent=11 // pred_check
          %p140 = pneg %p78
        $region14: #{patch_embed_3d.1} parent=11 // pred_check_branch
          %142 = sbr.rel (%p140) target = $region16
        $region15: #{patch_embed_3d.1} parent=11 // pred_region
          %s143 = smul.u32 16, %s22
          %p144 = scmp.lt.s32.totalorder %s143, 15
          %s145 = scalar_select %p144, %s143, 15
          %s146 = smul.addr %s145, 4
          %s147 = scalar_lea.vmem %s1, %s146
          %s148 = smul.u32 16, %s22
        $region16: #{patch_embed_3d.1} parent=11 // pred_fallthru
          _
        // Predicated region
        $region17: #{patch_embed_3d.1} parent=11 // pred_check
          %p149 = pneg %p99
        $region18: #{patch_embed_3d.1} parent=11 // pred_check_branch
          %151 = sbr.rel (%p149) target = $region20
        $region19: #{patch_embed_3d.1} parent=11 // pred_region
          _
        $region20: #{patch_embed_3d.1} parent=11 // pred_fallthru
          _
      $region12: #{patch_embed_3d.1} parent=5 // pred_fallthru
        _
      %p152 = scmp.lt.s32.totalorder %s12, 2
      // Predicated region
      $region21: #{patch_embed_3d.1} parent=5 // pred_check
        %p153 = pneg %p152
      $region22: #{patch_embed_3d.1} parent=5 // pred_check_branch
        %155 = sbr.rel (%p153) target = $region24
      $region23: #{patch_embed_3d.1} parent=5 // pred_region
        // Predicated region
        $region25: #{patch_embed_3d.1} parent=23 // pred_check
          %p156 = pneg %p46
        $region26: #{patch_embed_3d.1} parent=23 // pred_check_branch
          %158 = sbr.rel (%p156) target = $region28
        $region27: #{patch_embed_3d.1} parent=23 // pred_region
          %s159 = smul.u32 8, %s19
          %p160 = scmp.lt.s32.totalorder %s159, 15
          %s161 = scalar_select %p160, %s159, 15
          %p162 = scmp.lt.s32.totalorder %s20, 0
          %s163 = scalar_select %p162, %s20, 0
          %s164 = sadd.s32 %s163, %s161
          %s165 = smul.addr %s164, 4
          %s166 = scalar_lea.vmem %s0, %s165
          %s167 = smul.u32 8, %s19
        $region28: #{patch_embed_3d.1} parent=23 // pred_fallthru
          _
      $region24: #{patch_embed_3d.1} parent=5 // pred_fallthru
        _
      %p168 = scmp.le.s32.totalorder 1, %s12
      %p169 = scmp.lt.s32.totalorder %s12, 3
      %p170 = pnand %p168, %p169
      %p171 = pneg %p170
      // Predicated region
      $region29: #{patch_embed_3d.1} parent=5 // pred_check
        _
      $region30: #{patch_embed_3d.1} parent=5 // pred_check_branch
        %173 = sbr.rel (%p170) target = $region32
      $region31: #{patch_embed_3d.1} parent=5 // pred_region
        %s174 = ssub.s32 %s12, 1
        %s175 = smul.u32 8, %s21
        %p176 = scmp.lt.s32.totalorder %s175, 15
        %s177 = scalar_select %p176, %s175, 15
        %p178 = scmp.lt.s32.totalorder %s22, 0
        %s179 = scalar_select %p178, %s22, 0
        %s180 = sadd.s32 %s179, %s177
        %s181 = smul.addr %s180, 4
        %s182 = scalar_lea.vmem %s0, %s181
        %p183 = pneg %p52
        %p184 = pneg %p49
        %s185 = smul.u32 16, %s22
        %p186 = scmp.lt.s32.totalorder %s185, 15
        %s187 = scalar_select %p186, %s185, 15
        %s188 = smul.addr %s187, 4
        %s189 = scalar_lea.vmem %s1, %s188
        %p190 = pneg %p78
        %p191 = pneg %p75
        %p192 = pneg %p99
        %p193 = pneg %p96
        %p194 = pneg %p125
        %p195 = pneg %p122
        %s196 = sand.u32 %s112, 1
        %s197 = scalar_lea.sflag [#allocation4], %s196
        %s198 = sand.u32 %s112, 1
        %s199 = smul.addr %s198, 64
        %s200 = scalar_lea.vmem [#allocation3], %s199
        %s201 = smul.u32 8, %s21
        %p202 = scmp.lt.s32.totalorder %s201, 15
        %s203 = scalar_select %p202, %s201, 15
        %p204 = scmp.lt.s32.totalorder %s22, 0
        %s205 = scalar_select %p204, %s22, 0
        %s206 = sadd.s32 %s205, %s203
        %s207 = smul.addr %s206, 4
        %s208 = scalar_lea.vmem %s0, %s207
        %s209 = smul.u32 8, %s21
        %s210 = smul.u32 16, %s22
        %p211 = scmp.lt.s32.totalorder %s210, 15
        %s212 = scalar_select %p211, %s210, 15
        %s213 = smul.addr %s212, 4
        %s214 = scalar_lea.vmem %s1, %s213
        %s215 = smul.u32 16, %s22
        %s216 = smul.u32 8, %s21
        %p218 = scmp.eq.s32.totalorder %s22, 0
        // Predicated region
        $region33: #{patch_embed_3d.1} parent=31 // pred_check
          %p219 = pneg %p218
        $region34: #{patch_embed_3d.1} parent=31 // pred_check_branch
          %221 = sbr.rel (%p219) target = $region36
        $region35: #{patch_embed_3d.1} parent=31 // pred_region
          %222 = vst [vmem:[#allocation2] sm:$0xff] 0.0
          %223 = vst [vmem:[#allocation2 + $0x8] sm:$0xff] 0.0
          %224 = vst [vmem:[#allocation2 + $0x10] sm:$0xff] 0.0
          %225 = vst [vmem:[#allocation2 + $0x18] sm:$0xff] 0.0
          %226 = vst [vmem:[#allocation2 + $0x20] sm:$0xff] 0.0
          %227 = vst [vmem:[#allocation2 + $0x28] sm:$0xff] 0.0
          %228 = vst [vmem:[#allocation2 + $0x30] sm:$0xff] 0.0
          %229 = vst [vmem:[#allocation2 + $0x38] sm:$0xff] 0.0
        $region36: #{patch_embed_3d.1} parent=31 // pred_fallthru
          _
        %v230 = vld [vmem:[#allocation2] sm:$0xff]
        %v231 = vld [vmem:[#allocation2 + $0x8] sm:$0xff]
        %v232 = vld [vmem:[#allocation2 + $0x10] sm:$0xff]
        %v233 = vld [vmem:[#allocation2 + $0x18] sm:$0xff]
        %v234 = vld [vmem:[#allocation2 + $0x20] sm:$0xff]
        %v235 = vld [vmem:[#allocation2 + $0x28] sm:$0xff]
        %v236 = vld [vmem:[#allocation2 + $0x30] sm:$0xff]
        %v237 = vld [vmem:[#allocation2 + $0x38] sm:$0xff]
        %v238 = vld [vmem:[%s208] sm:$0xf]
        %v239 = vld [vmem:[%s208 + $0x4] sm:$0xf]
        %v240 = vld [vmem:[%s208 + $0x8] sm:$0xf]
        %v241 = vld [vmem:[%s208 + $0xc] sm:$0xf]
        %v242 = vld [vmem:[%s208 + $0x10] sm:$0xf]
        %v243 = vld [vmem:[%s208 + $0x14] sm:$0xf]
        %v244 = vld [vmem:[%s208 + $0x18] sm:$0xf]
        %v245 = vld [vmem:[%s208 + $0x1c] sm:$0xf]
        %v246 = vld [vmem:[%s214] sm:$0xf]
        %v247 = vld [vmem:[%s214 + $0x4] sm:$0xf]
        %v248 = vld [vmem:[%s214 + $0x8] sm:$0xf]
        %v249 = vld [vmem:[%s214 + $0xc] sm:$0xf]
        %v250 = vld [vmem:[%s214 + $0x10] sm:$0xf]
        %v251 = vld [vmem:[%s214 + $0x14] sm:$0xf]
        %v252 = vld [vmem:[%s214 + $0x18] sm:$0xf]
        %v253 = vld [vmem:[%s214 + $0x1c] sm:$0xf]
        %v254 = vld [vmem:[%s214 + $0x20] sm:$0xf]
        %v255 = vld [vmem:[%s214 + $0x24] sm:$0xf]
        %v256 = vld [vmem:[%s214 + $0x28] sm:$0xf]
        %v257 = vld [vmem:[%s214 + $0x2c] sm:$0xf]
        %v258 = vld [vmem:[%s214 + $0x30] sm:$0xf]
        %v259 = vld [vmem:[%s214 + $0x34] sm:$0xf]
        %v260 = vld [vmem:[%s214 + $0x38] sm:$0xf]
        %v261 = vld [vmem:[%s214 + $0x3c] sm:$0xf]
        %v270 = vunpack.c.l.b16 %v238
        %v271 = vunpack.c.l.b16 %v239
        %v272 = vunpack.c.l.b16 %v240
        %v273 = vunpack.c.l.b16 %v241
        %v274 = vunpack.c.l.b16 %v242
        %v275 = vunpack.c.l.b16 %v243
        %v276 = vunpack.c.l.b16 %v244
        %v277 = vunpack.c.l.b16 %v245
        %v278 = vpack.c.b16 %v271, %v270
        %v279 = vpack.c.b16 %v273, %v272
        %v280 = vpack.c.b16 %v275, %v274
        %v281 = vpack.c.b16 %v277, %v276
        %v302 = vunpack.c.l.b16 %v246
        %v303 = vunpack.c.l.b16 %v247
        %v304 = vunpack.c.l.b16 %v248
        %v305 = vunpack.c.l.b16 %v249
        %v306 = vunpack.c.l.b16 %v250
        %v307 = vunpack.c.l.b16 %v251
        %v308 = vunpack.c.l.b16 %v252
        %v309 = vunpack.c.l.b16 %v253
        %v310 = vunpack.c.l.b16 %v254
        %v311 = vunpack.c.l.b16 %v255
        %v312 = vunpack.c.l.b16 %v256
        %v313 = vunpack.c.l.b16 %v257
        %v314 = vunpack.c.l.b16 %v258
        %v315 = vunpack.c.l.b16 %v259
        %v316 = vunpack.c.l.b16 %v260
        %v317 = vunpack.c.l.b16 %v261
        %v318 = vpack.c.b16 %v303, %v302
        %v319 = vpack.c.b16 %v305, %v304
        %v320 = vpack.c.b16 %v307, %v306
        %v321 = vpack.c.b16 %v309, %v308
        %v322 = vpack.c.b16 %v311, %v310
        %v323 = vpack.c.b16 %v313, %v312
        %v324 = vpack.c.b16 %v315, %v314
        %v325 = vpack.c.b16 %v317, %v316
        %334 = vmatprep.subr.bf16.mxu0 0
        %335 = vmatpush1.bf16.msra.mxu0 %v325
        %336 = vmatprep.subr.bf16.mxu0 0
        %337 = vmatpush1.bf16.msra.mxu0 %v324
        %338 = vmatprep.subr.bf16.mxu0 0
        %339 = vmatpush1.bf16.msra.mxu0 %v323
        %340 = vmatprep.subr.bf16.mxu0 0
        %341 = vmatpush1.bf16.msra.mxu0 %v322
        %342 = vmatprep.subr.bf16.mxu0 0
        %343 = vmatpush1.bf16.msra.mxu0 %v321
        %344 = vmatprep.subr.bf16.mxu0 0
        %345 = vmatpush1.bf16.msra.mxu0 %v320
        %346 = vmatprep.subr.bf16.mxu0 0
        %347 = vmatpush1.bf16.msra.mxu0 %v319
        %348 = vmatprep.subr.bf16.mxu0 0
        %349 = vmatpush1.bf16.msra.mxu0 %v318
        %350 = vmatprep.subr.bf16.mxu0 0
        %351 = vmatpush2.bf16.msra.mxu0 0
        %352 = vmatprep.subr.bf16.mxu0 0
        %353 = vmatpush2.bf16.msra.mxu0 0
        %354 = vmatprep.subr.bf16.mxu0 0
        %355 = vmatpush2.bf16.msra.mxu0 0
        %356 = vmatprep.subr.bf16.mxu0 0
        %357 = vmatpush2.bf16.msra.mxu0 0
        %358 = vmatprep.subr.bf16.mxu0 0
        %359 = vmatpush2.bf16.msra.mxu0 0
        %360 = vmatprep.subr.bf16.mxu0 0
        %361 = vmatpush2.bf16.msra.mxu0 0
        %362 = vmatprep.subr.bf16.mxu0 0
        %363 = vmatpush2.bf16.msra.mxu0 0
        %364 = vmatprep.subr.bf16.mxu0 0
        %365 = vmatpush2.bf16.msra.mxu0 0
        %366 = vmatprep.mubr.bf16.mxu0 0
        %367 = vmatmul.mubr.bf16.gmra.mxu0 %v278
        %v368 = vpop.f32.mrf.mxu0
        %v369 = vadd.f32 0.0, %v368
        %v370 = vpop.f32.mrf.mxu0
        %v371 = vpop.f32.mrf.mxu0
        %v372 = vadd.f32 0.0, %v371
        %v373 = vpop.f32.mrf.mxu0
        %374 = vmatprep.mubr.bf16.mxu0 0
        %375 = vmatmul.mubr.bf16.gmra.mxu0 %v279
        %v376 = vpop.f32.mrf.mxu0
        %v377 = vadd.f32 0.0, %v376
        %v378 = vpop.f32.mrf.mxu0
        %v379 = vpop.f32.mrf.mxu0
        %v380 = vadd.f32 0.0, %v379
        %v381 = vpop.f32.mrf.mxu0
        %382 = vmatprep.mubr.bf16.mxu0 0
        %383 = vmatmul.mubr.bf16.gmra.mxu0 %v280
        %v384 = vpop.f32.mrf.mxu0
        %v385 = vadd.f32 0.0, %v384
        %v386 = vpop.f32.mrf.mxu0
        %v387 = vpop.f32.mrf.mxu0
        %v388 = vadd.f32 0.0, %v387
        %v389 = vpop.f32.mrf.mxu0
        %390 = vmatprep.mubr.bf16.mxu0 0
        %391 = vmatmul.mubr.bf16.gmra.mxu0 %v281
        %v392 = vpop.f32.mrf.mxu0
        %v393 = vadd.f32 0.0, %v392
        %v394 = vpop.f32.mrf.mxu0
        %v395 = vpop.f32.mrf.mxu0
        %v396 = vadd.f32 0.0, %v395
        %v397 = vpop.f32.mrf.mxu0
        %398 = vdwg.mxu0
        %v399 = vadd.f32 %v230, %v369
        %v400 = vadd.f32 %v231, %v372
        %v401 = vadd.f32 %v232, %v377
        %v402 = vadd.f32 %v233, %v380
        %v403 = vadd.f32 %v234, %v385
        %v404 = vadd.f32 %v235, %v388
        %v405 = vadd.f32 %v236, %v393
        %v406 = vadd.f32 %v237, %v396
        %407 = vst [vmem:[#allocation2] sm:$0xff] %v399
        %408 = vst [vmem:[#allocation2 + $0x8] sm:$0xff] %v400
        %409 = vst [vmem:[#allocation2 + $0x10] sm:$0xff] %v401
        %410 = vst [vmem:[#allocation2 + $0x18] sm:$0xff] %v402
        %411 = vst [vmem:[#allocation2 + $0x20] sm:$0xff] %v403
        %412 = vst [vmem:[#allocation2 + $0x28] sm:$0xff] %v404
        %413 = vst [vmem:[#allocation2 + $0x30] sm:$0xff] %v405
        %414 = vst [vmem:[#allocation2 + $0x38] sm:$0xff] %v406
        // Predicated region
        $region37: #{patch_embed_3d.1} parent=31 // pred_check
          %p415 = pneg %p218
        $region38: #{patch_embed_3d.1} parent=31 // pred_check_branch
          %417 = sbr.rel (%p415) target = $region40
        $region39: #{patch_embed_3d.1} parent=31 // pred_region
          %v418 = vld [vmem:[#allocation2] sm:$0xff]
          %v419 = vld [vmem:[#allocation2 + $0x8] sm:$0xff]
          %v420 = vld [vmem:[#allocation2 + $0x10] sm:$0xff]
          %v421 = vld [vmem:[#allocation2 + $0x18] sm:$0xff]
          %v422 = vld [vmem:[#allocation2 + $0x20] sm:$0xff]
          %v423 = vld [vmem:[#allocation2 + $0x28] sm:$0xff]
          %v424 = vld [vmem:[#allocation2 + $0x30] sm:$0xff]
          %v425 = vld [vmem:[#allocation2 + $0x38] sm:$0xff]
          %v426 = vld [vmem:[%s2] sm:$0x1]
          %v428 = vlaneseq
          %v429 = vshrl.u32 %v428, 7
          %v430 = vsub.s32 0, %v429
          %v431 = vrot.slane %v426, %v430
          %v433 = vadd.f32 %v418, %v431
          %v434 = vadd.f32 %v419, %v431
          %v435 = vadd.f32 %v420, %v431
          %v436 = vadd.f32 %v421, %v431
          %v437 = vadd.f32 %v422, %v431
          %v438 = vadd.f32 %v423, %v431
          %v439 = vadd.f32 %v424, %v431
          %v440 = vadd.f32 %v425, %v431
          %441 = vst [vmem:[%s200] sm:$0xff] %v433
          %442 = vst [vmem:[%s200 + $0x8] sm:$0xff] %v434
          %443 = vst [vmem:[%s200 + $0x10] sm:$0xff] %v435
          %444 = vst [vmem:[%s200 + $0x18] sm:$0xff] %v436
          %445 = vst [vmem:[%s200 + $0x20] sm:$0xff] %v437
          %446 = vst [vmem:[%s200 + $0x28] sm:$0xff] %v438
          %447 = vst [vmem:[%s200 + $0x30] sm:$0xff] %v439
          %448 = vst [vmem:[%s200 + $0x38] sm:$0xff] %v440
        $region40: #{patch_embed_3d.1} parent=31 // pred_fallthru
          _
        %s449 = sand.u32 %s112, 1
        %s450 = scalar_lea.sflag [#allocation4], %s449
        %s451 = sand.u32 %s112, 1
        %s452 = smul.addr %s451, 64
        %s453 = scalar_lea.vmem [#allocation3], %s452
        // Predicated region
        $region41: #{patch_embed_3d.1} parent=31 // pred_check
          %p454 = pneg %p122
        $region42: #{patch_embed_3d.1} parent=31 // pred_check_branch
          %456 = sbr.rel (%p454) target = $region44
        $region43: #{patch_embed_3d.1} parent=31 // pred_region
          %s457 = smul.u32 8, %s21
          %s459 = ssub.s32 1024, 1024
          %460 = vsyncadd %s450, %s459
          %s461 = smul.addr %s457, 128
          %s462 = scalar_lea.hbm %s3, %s461
          %s463 = sshll.u32 %s453, 4
          %s464 = int_to_ptr.vmem [resolvable:$true] %s463
          %469 = dma.vmem_to_hbm [thread:$0]  %s464, 1024, %s462, %s450, 128, 128, 8
        $region44: #{patch_embed_3d.1} parent=31 // pred_fallthru
          _
      $region32: #{patch_embed_3d.1} parent=5 // pred_fallthru
        _
      %p470 = scmp.le.s32.totalorder 2, %s12
      // Predicated region
      $region45: #{patch_embed_3d.1} parent=5 // pred_check
        %p471 = pneg %p470
      $region46: #{patch_embed_3d.1} parent=5 // pred_check_branch
        %473 = sbr.rel (%p471) target = $region48
      $region47: #{patch_embed_3d.1} parent=5 // pred_region
        %s474 = ssub.s32 %s12, 2
        // Predicated region
        $region49: #{patch_embed_3d.1} parent=47 // pred_check
          %p475 = pneg %p128
        $region50: #{patch_embed_3d.1} parent=47 // pred_check_branch
          %477 = sbr.rel (%p475) target = $region52
        $region51: #{patch_embed_3d.1} parent=47 // pred_region
          %s478 = sand.u32 %s113, 1
          %s479 = scalar_lea.sflag [#allocation4], %s478
          %s480 = sand.u32 %s113, 1
          %s481 = smul.addr %s480, 64
          %s482 = scalar_lea.vmem [#allocation3], %s481
          %483 = dma.done %s479, 1024
        $region52: #{patch_embed_3d.1} parent=47 // pred_fallthru
          _
      $region48: #{patch_embed_3d.1} parent=5 // pred_fallthru
        _
    $region6: #{patch_embed_3d.1} parent=1 // loop_footer
      %s16 = sadd.s32 1, %s12
    $region7: #{patch_embed_3d.1} parent=1 // loop_footer_branch
      %11 = sbr.rel target = $region3
    $region8: #{patch_embed_3d.1} parent=1 // loop_exit
      _
    %484 = vsyncpa [#allocation4], 1
    %s485 = scalar_lea.sflag [#allocation4], 1
    %486 = vsyncpa %s485, 1

</llo_original>
